<compile_context>
chip_gen: v7x
topology: tpu7x:2x2x1
jax: 0.10.0
libtpu: 0.0.40
codegen_flags: <defaults>
</compile_context>

<pallas_src>
import jax
import jax.numpy as jnp
from jax.experimental import pallas as pl
from jax.experimental.pallas import tpu as pltpu


_LANES = 512              # slab width: large multiple of 128 -> unmasked stores
_MAX_BLOCK_ROWS = 2048    # 2048 * 512 * 4 B = 4 MiB per block
_SMALL_N_FASTPATH = 4096  # clouds smaller than this use fused XLA directly


def _round_up(v, m):
    return ((v + m - 1) // m) * m


def _transform_kernel(params_ref, v_ref, out_ref):
    # params_ref (SMEM, f32[4]): [cos_r, sin_r, off_x, off_y]
    c = params_ref[0]
    s = params_ref[1]
    off_x = params_ref[2]
    off_y = params_ref[3]

    w = v_ref.shape[1]

    # Lane-parity coefficient rows (only (1, W); built once per block).
    lane = jax.lax.broadcasted_iota(jnp.int32, (1, w), 1)
    is_x = (lane & 1) == 0
    a_row = jnp.where(is_x, -s, 0.0)        # weight of the i+1 neighbour (y partner of x)
    b_row = jnp.where(is_x, 0.0, s)         # weight of the i-1 neighbour (x partner of y)
    off_row = jnp.where(is_x, off_x, off_y)

    v = v_ref[...]                          # interleaved [x, y, x, y, ...] per row
    nxt = pltpu.roll(v, w - 1, axis=1)      # nxt[i] = v[i+1]  (cyclic wrap is zero-weighted)
    prv = pltpu.roll(v, 1, axis=1)          # prv[i] = v[i-1]

    # x lanes: x*c - y*s + off_x ; y lanes: y*c + x*s + off_y
    out_ref[...] = v * c + nxt * a_row + prv * b_row + off_row


def twod_transform(points, rotation, translation, center):
    """points: (N, 2) f32; rotation: (1,); translation: (2,); center: (2,)."""
    points = jnp.asarray(points, jnp.float32)
    rotation = jnp.asarray(rotation, jnp.float32)
    translation = jnp.asarray(translation, jnp.float32)
    center = jnp.asarray(center, jnp.float32)
    n = points.shape[0]

    # Scalar parameter folding (done once, in the wrapper).
    r = rotation[0]
    c = jnp.cos(r)
    s = jnp.sin(r)
    cx, cy = center[0], center[1]
    tx, ty = translation[0], translation[1]
    off_x = cx * (1.0 - c) + cy * s + tx
    off_y = cy * (1.0 - c) - cx * s + ty

    if n < _SMALL_N_FASTPATH:
        # pallas_call fixed overhead dominates tiny clouds; fused XLA is faster.
        x, y = points[:, 0], points[:, 1]
        return jnp.stack([x * c - y * s + off_x, x * s + y * c + off_y], axis=-1)

    params = jnp.stack([c, s, off_x, off_y]).astype(jnp.float32)

    # Tiling geometry: interleaved flat stream of 2N floats -> (rows, 512).
    total = 2 * n
    rows = pl.cdiv(total, _LANES)
    nblocks = max(pl.cdiv(rows, _MAX_BLOCK_ROWS), 2 if rows >= 16 else 1)
    block_rows = _round_up(pl.cdiv(rows, nblocks), 8)      # <= _MAX_BLOCK_ROWS
    grid = (pl.cdiv(rows, block_rows),)                    # ragged tail block is masked

    total_slab = rows * _LANES
    flat = points.reshape(-1)                              # free reshape, no transpose
    if total_slab != total:
        # TODO(synk): ragged tails cost one XLA pad + one slice copy; a manual
        # pl.ANY + DMA kernel could stream the exact (N,2) buffer instead.
        flat = jnp.pad(flat, (0, total_slab - total))
    slab = flat.reshape(rows, _LANES)

    out = pl.pallas_call(
        _transform_kernel,
        grid=grid,
        in_specs=[
            pl.BlockSpec(memory_space=pltpu.MemorySpace.SMEM),        # params
            pl.BlockSpec((block_rows, _LANES), lambda i: (i, 0)),     # interleaved slab
        ],
        out_specs=pl.BlockSpec((block_rows, _LANES), lambda i: (i, 0)),
        out_shape=jax.ShapeDtypeStruct((rows, _LANES), jnp.float32),
        compiler_params=pltpu.CompilerParams(
            dimension_semantics=("parallel",),
            vmem_limit_bytes=32 * 1024 * 1024,
        ),
        cost_estimate=pl.CostEstimate(
            flops=8 * total_slab,
            transcendentals=0,
            bytes_accessed=2 * 4 * total_slab,
        ),
    )(params, slab)

    out_flat = out.reshape(-1)                             # free reshape, no transpose
    if total_slab != total:
        out_flat = out_flat[:total]
    return out_flat.reshape(n, 2)


def _reference(points, rotation, translation, center):
    r = rotation[0]
    c, s = jnp.cos(r), jnp.sin(r)
    xp = (points[:, 0] * c - points[:, 1] * s
          + center[0] * (1 - c) + center[1] * s + translation[0])
    yp = (points[:, 0] * s + points[:, 1] * c
          + center[1] * (1 - c) - center[0] * s + translation[1])
    return jnp.stack([xp, yp], axis=-1)


if __name__ == "__main__":
    key = jax.random.PRNGKey(0)

    # Module __init__: rotation = zeros(1), translation = zeros(2); center is a
    # constructor argument.  Nonzero synthetic values exercise the full formula.
    rotation = jnp.array([0.3], dtype=jnp.float32)
    translation = jnp.array([1.5, -2.25], dtype=jnp.float32)
    center = jnp.array([4.0, 4.0], dtype=jnp.float32)

    ok = True
    # 256   -> jnp fast path
    # 8192  -> Pallas path, aligned (no pad / no slice copies)
    # 10001 -> Pallas path, ragged (tail pad + boundary-masked block)
    for N in (256, 8192, 10001):
        k1, key = jax.random.split(key)
        points = jax.random.normal(k1, (N, 2), dtype=jnp.float32) * 8.0

        out = jax.block_until_ready(
            twod_transform(points, rotation, translation, center))
        ref = _reference(points, rotation, translation, center)

        ok = ok and (out.shape == (N, 2))
        ok = ok and bool(jnp.allclose(out, ref, atol=1e-4, rtol=1e-5))

    assert ok, "mismatch vs reference"
    print("KERNEL_OK")
</pallas_src>

<mosaic_0001>
module attributes {stable_mosaic.version = 11 : i64} {
  func.func @_transform_kernel(%arg0: i32, %arg1: memref<4xf32, #tpu.memory_space<smem>>, %arg2: memref<16x512xf32, #tpu.memory_space<vmem>>, %arg3: memref<16x512xf32, #tpu.memory_space<vmem>>) attributes {dimension_semantics = [#tpu.dimension_semantics<parallel>], iteration_bounds = array<i64: 2>, scalar_prefetch = 0 : i64, scratch_operands = 0 : i64, tpu.core_type = #tpu.core_type<tc>, window_params = [{transform_indices = @transform_0, window_bounds = array<i64: 4>}, {transform_indices = @transform_1, window_bounds = array<i64: 16, 512>}, {transform_indices = @transform_2, window_bounds = array<i64: 16, 512>}]} {
    %c0 = arith.constant 0 : index
    %0 = memref.load %arg1[%c0] : memref<4xf32, #tpu.memory_space<smem>>
    %c1 = arith.constant 1 : index
    %1 = memref.load %arg1[%c1] : memref<4xf32, #tpu.memory_space<smem>>
    %c2 = arith.constant 2 : index
    %2 = memref.load %arg1[%c2] : memref<4xf32, #tpu.memory_space<smem>>
    %c3 = arith.constant 3 : index
    %3 = memref.load %arg1[%c3] : memref<4xf32, #tpu.memory_space<smem>>
    %4 = tpu.iota {dimensions = array<i32: 1>} : vector<1x512xi32>
    %c1_i32 = arith.constant 1 : i32
    %5 = vector.broadcast %c1_i32 : i32 to vector<1x512xi32>
    %6 = arith.andi %4, %5 : vector<1x512xi32>
    %c0_i32 = arith.constant 0 : i32
    %7 = vector.broadcast %c0_i32 : i32 to vector<1x512xi32>
    %8 = arith.cmpi eq, %6, %7 : vector<1x512xi32>
    %cst = arith.constant 0.000000e+00 : f32
    %9 = arith.subf %cst, %1 : f32
    %cst_0 = arith.constant 0.000000e+00 : f32
    %10 = vector.broadcast %9 : f32 to vector<1x512xf32>
    %11 = vector.broadcast %cst_0 : f32 to vector<1x512xf32>
    %12 = arith.select %8, %10, %11 : vector<1x512xi1>, vector<1x512xf32>
    %cst_1 = arith.constant 0.000000e+00 : f32
    %13 = vector.broadcast %cst_1 : f32 to vector<1x512xf32>
    %14 = vector.broadcast %1 : f32 to vector<1x512xf32>
    %15 = arith.select %8, %13, %14 : vector<1x512xi1>, vector<1x512xf32>
    %16 = vector.broadcast %2 : f32 to vector<1x512xf32>
    %17 = vector.broadcast %3 : f32 to vector<1x512xf32>
    %18 = arith.select %8, %16, %17 : vector<1x512xi1>, vector<1x512xf32>
    %c0_2 = arith.constant 0 : index
    %c0_3 = arith.constant 0 : index
    %19 = vector.load %arg2[%c0_2, %c0_3] : memref<16x512xf32, #tpu.memory_space<vmem>>, vector<16x512xf32>
    %c511_i32 = arith.constant 511 : i32
    %20 = tpu.dynamic_rotate %19 by %c511_i32 dim 1 : vector<16x512xf32>, i32 -> vector<16x512xf32>
    %c1_i32_4 = arith.constant 1 : i32
    %21 = tpu.dynamic_rotate %19 by %c1_i32_4 dim 1 : vector<16x512xf32>, i32 -> vector<16x512xf32>
    %22 = vector.broadcast %0 : f32 to vector<16x512xf32>
    %23 = arith.mulf %19, %22 : vector<16x512xf32>
    %24 = vector.broadcast %12 : vector<1x512xf32> to vector<16x512xf32>
    %25 = arith.mulf %20, %24 : vector<16x512xf32>
    %26 = arith.addf %23, %25 : vector<16x512xf32>
    %27 = vector.broadcast %15 : vector<1x512xf32> to vector<16x512xf32>
    %28 = arith.mulf %21, %27 : vector<16x512xf32>
    %29 = arith.addf %26, %28 : vector<16x512xf32>
    %30 = vector.broadcast %18 : vector<1x512xf32> to vector<16x512xf32>
    %31 = arith.addf %29, %30 : vector<16x512xf32>
    %c0_5 = arith.constant 0 : index
    %c0_6 = arith.constant 0 : index
    %32 = vector.load %arg3[%c0_5, %c0_6] : memref<16x512xf32, #tpu.memory_space<vmem>>, vector<16x512xf32>
    tpu.vector_store %arg3[%c0_5, %c0_6], %31 {strides = array<i32>} : memref<16x512xf32, #tpu.memory_space<vmem>>, vector<16x512xf32>,
    return
  }
  func.func @transform_0(%arg0: i32) -> i32 {
    %c0_i32 = arith.constant 0 : i32
    %c0_i32_0 = arith.constant 0 : i32
    return %c0_i32 : i32
  }
  func.func @transform_1(%arg0: i32) -> (i32, i32) {
    %c0_i32 = arith.constant 0 : i32
    %c0_i32_0 = arith.constant 0 : i32
    return %arg0, %c0_i32 : i32, i32
  }
  func.func @transform_2(%arg0: i32) -> (i32, i32) {
    %c0_i32 = arith.constant 0 : i32
    %c0_i32_0 = arith.constant 0 : i32
    return %arg0, %c0_i32 : i32, i32
  }
}

</mosaic_0001>

<llo_original>
// kernel: tpu_custom_call.1
$region0: #{tpu_custom_call.1}
  #allocation0 [shape = 'u32[]', space=smem, size = 0x4, offset = 0x4, fixed_abs, tag = 'smem constant byte address 0x4 - core index']
  #allocation1 [shape = 'u32[144,128]{1,0:T(1,128)}', space=vmem, size = 0x12000, scoped, tag = 'internal scratch']
  %s0 = inlined_call_operand.hbm [shape: f32[4], index: 0, kind: input, shape index: {}]
  %s1 = inlined_call_operand.hbm [shape: f32[32,512], index: 1, kind: input, shape index: {}]
  %s2 = inlined_call_operand.hbm [shape: f32[32,512], index: 2, kind: output, shape index: {}]
  %s3 = sld [smem:[#allocation0]]
  $region49: #{tpu_custom_call.1} parent=0
    _
  %s5 = ssub.s32 1, %s3
  %s6 = scalar_select 0, %s5, %s3
  $region1: #{tpu_custom_call.1} parent=0
    #allocation2 [shape = 'u8[512]{0}', space=smem, size = 0x200, scoped, tag = 'input window, operand 0, single buffered']
    #allocation3 [shape = 's32[2]{0}', space=sflag, size = 0x8, scoped, tag = 'scoped memory for tpu_custom_call.1']
    #allocation4 [shape = 's32[2]{0}', space=sflag, size = 0x8, scoped, tag = 'scoped memory for tpu_custom_call.1']
    #allocation5 [shape = 's32[2]{0}', space=sflag, size = 0x8, scoped, tag = 'scoped memory for tpu_custom_call.1']
    #allocation6 [shape = 'u8[65536]{0}', space=vmem, size = 0x10000, scoped, tag = 'input window, operand 1']
    #allocation7 [shape = 'u8[65536]{0}', space=vmem, size = 0x10000, scoped, tag = 'output window, operand 0']
    %7 = vsyncpa [#allocation5], 0
    %8 = vsyncpa [#allocation3], 0
    %s9 = scalar_lea.sflag [#allocation3], 1
    %10 = vsyncpa %s9, 0
    %11 = vsyncpa [#allocation4], 0
    %s12 = scalar_lea.sflag [#allocation4], 1
    %13 = vsyncpa %s12, 0
    loop: start=0, step=1, limit=4
    $region2: #{tpu_custom_call.1} parent=1 // loop_pre_header
      _
    $region3: #{tpu_custom_call.1} parent=1 // loop_header
      %s15 = sphi 0, %s19
      %p16 = scmp.ge.s32.totalorder %s15, 4
      %s23 = sphi 0, %s23
      %s25 = sphi 0, %s23
      %s26 = sphi 0, %s25
      %s40 = sphi 0, %s26
      %s46 = sphi 0, %s48
      %s49 = sphi 0, %s46
      %s50 = sphi 0, %s49
      %s66 = sphi 0, %s50
      %s72 = sphi 0, %s74
      %s75 = sphi 0, %s72
      %s76 = sphi 0, %s75
      %s92 = sphi 0, %s76
    $region4: #{tpu_custom_call.1} parent=1 // loop_header_branch
      %18 = sbr.rel (%p16) target = $region8
    $region5: #{tpu_custom_call.1} parent=1 // loop_body
      %s20 = ssub.s32 %s15, 1
      %s21 = ssub.s32 %s15, 2
      %s22 = sadd.s32 %s15, 1
      %s24 = sadd.s32 %s23, 1
      %p27 = scmp.eq.s32.totalorder %s15, 1
      %p28 = scmp.ne.s32.totalorder %s23, %s25
      %p29 = scmp.eq.s32.totalorder %s15, 0
      %p30 = por %p28, %p29
      %p31 = scmp.ne.s32.totalorder %s23, %s25
      %p32 = scmp.eq.s32.totalorder %s20, 1
      %p33 = por %p31, %p32
      %p34 = scmp.ne.s32.totalorder %s25, %s26
      %p35 = scmp.eq.s32.totalorder %s20, 0
      %p36 = por %p34, %p35
      %p37 = scmp.ne.s32.totalorder %s25, %s26
      %p38 = scmp.eq.s32.totalorder %s21, 1
      %p39 = por %p37, %p38
      %p41 = scmp.ne.s32.totalorder %s26, %s40
      %p42 = scmp.eq.s32.totalorder %s21, 0
      %p43 = por %p41, %p42
      %s44 = ssub.s32 %s15, %s22
      %p45 = scmp.eq.s32.totalorder %s44, 0
      %s47 = sadd.s32 %s46, 1
      %s48 = scalar_select %p45, %s46, %s47
      %p51 = pneg %p45
      %p52 = scmp.eq.s32.totalorder %s15, 1
      %p53 = por %p51, %p52
      %p54 = scmp.ne.s32.totalorder %s46, %s49
      %p55 = scmp.eq.s32.totalorder %s15, 0
      %p56 = por %p54, %p55
      %p57 = scmp.ne.s32.totalorder %s46, %s49
      %p58 = scmp.eq.s32.totalorder %s20, 1
      %p59 = por %p57, %p58
      %p60 = scmp.ne.s32.totalorder %s49, %s50
      %p61 = scmp.eq.s32.totalorder %s20, 0
      %p62 = por %p60, %p61
      %p63 = scmp.ne.s32.totalorder %s49, %s50
      %p64 = scmp.eq.s32.totalorder %s21, 1
      %p65 = por %p63, %p64
      %p67 = scmp.ne.s32.totalorder %s50, %s66
      %p68 = scmp.eq.s32.totalorder %s21, 0
      %p69 = por %p67, %p68
      %s70 = ssub.s32 %s15, %s22
      %p71 = scmp.eq.s32.totalorder %s70, 0
      %s73 = sadd.s32 %s72, 1
      %s74 = scalar_select %p71, %s72, %s73
      %p77 = pneg %p71
      %p78 = scmp.eq.s32.totalorder %s15, 1
      %p79 = por %p77, %p78
      %p80 = scmp.ne.s32.totalorder %s72, %s75
      %p81 = scmp.eq.s32.totalorder %s15, 0
      %p82 = por %p80, %p81
      %p83 = scmp.ne.s32.totalorder %s72, %s75
      %p84 = scmp.eq.s32.totalorder %s20, 1
      %p85 = por %p83, %p84
      %p86 = scmp.ne.s32.totalorder %s75, %s76
      %p87 = scmp.eq.s32.totalorder %s20, 0
      %p88 = por %p86, %p87
      %p89 = scmp.ne.s32.totalorder %s75, %s76
      %p90 = scmp.eq.s32.totalorder %s21, 1
      %p91 = por %p89, %p90
      %p93 = scmp.ne.s32.totalorder %s76, %s92
      %p94 = scmp.eq.s32.totalorder %s21, 0
      %p95 = por %p93, %p94
      %p96 = scmp.le.s32.totalorder 1, %s15
      %p97 = scmp.lt.s32.totalorder %s15, 3
      %p98 = pnand %p96, %p97
      %p99 = pneg %p98
      // Predicated region
      $region9: #{tpu_custom_call.1} parent=5 // pred_check
        _
      $region10: #{tpu_custom_call.1} parent=5 // pred_check_branch
        %101 = sbr.rel (%p98) target = $region12
      $region11: #{tpu_custom_call.1} parent=5 // pred_region
        %s102 = ssub.s32 %s15, 1
        // Predicated region
        $region13: #{tpu_custom_call.1} parent=11 // pred_check
          %p103 = pneg %p36
        $region14: #{tpu_custom_call.1} parent=11 // pred_check_branch
          %105 = sbr.rel (%p103) target = $region16
        $region15: #{tpu_custom_call.1} parent=11 // pred_region
          %s107 = ssub.s32 16, 16
          %108 = vsyncadd [#allocation5], %s107
          %111 = dma.hbm_to_smem %s0, 16, [#allocation2], [#allocation5]
        $region16: #{tpu_custom_call.1} parent=11 // pred_fallthru
          _
      $region12: #{tpu_custom_call.1} parent=5 // pred_fallthru
        _
      %p112 = scmp.lt.s32.totalorder %s15, 2
      // Predicated region
      $region17: #{tpu_custom_call.1} parent=5 // pred_check
        %p113 = pneg %p112
      $region18: #{tpu_custom_call.1} parent=5 // pred_check_branch
        %115 = sbr.rel (%p113) target = $region20
      $region19: #{tpu_custom_call.1} parent=5 // pred_region
        // Predicated region
        $region21: #{tpu_custom_call.1} parent=19 // pred_check
          %p116 = pneg %p56
        $region22: #{tpu_custom_call.1} parent=19 // pred_check_branch
          %118 = sbr.rel (%p116) target = $region24
        $region23: #{tpu_custom_call.1} parent=19 // pred_region
          %s119 = sand.u32 %s46, 1
          %s120 = scalar_lea.sflag [#allocation3], %s119
          %s121 = sand.u32 %s46, 1
          %s122 = smul.addr %s121, 64
          %s123 = scalar_lea.vmem [#allocation6], %s122
          %s124 = smul.u32 2, %s15
          %s126 = ssub.s32 1024, 1024
          %127 = vsyncadd %s120, %s126
          %s128 = smul.addr %s124, 4
          %s129 = smul.addr %s128, 128
          %s130 = scalar_lea.hbm %s1, %s129
          %s131 = sshll.u32 %s123, 4
          %s132 = int_to_ptr.vmem [resolvable:$true] %s131
          %137 = dma.hbm_to_vmem [thread:$0]  %s130, 1024, %s132, %s120, 512, 512, 32
        $region24: #{tpu_custom_call.1} parent=19 // pred_fallthru
          _
      $region20: #{tpu_custom_call.1} parent=5 // pred_fallthru
        _
      %p138 = scmp.le.s32.totalorder 1, %s15
      %p139 = scmp.lt.s32.totalorder %s15, 3
      %p140 = pnand %p138, %p139
      %p141 = pneg %p140
      // Predicated region
      $region25: #{tpu_custom_call.1} parent=5 // pred_check
        _
      $region26: #{tpu_custom_call.1} parent=5 // pred_check_branch
        %143 = sbr.rel (%p140) target = $region28
      $region27: #{tpu_custom_call.1} parent=5 // pred_region
        %s144 = ssub.s32 %s15, 1
        // Predicated region
        $region29: #{tpu_custom_call.1} parent=27 // pred_check
          %p145 = pneg %p36
        $region30: #{tpu_custom_call.1} parent=27 // pred_check_branch
          %147 = sbr.rel (%p145) target = $region32
        $region31: #{tpu_custom_call.1} parent=27 // pred_region
          %148 = dma.done [#allocation5], 16
        $region32: #{tpu_custom_call.1} parent=27 // pred_fallthru
          _
        %s149 = sand.u32 %s49, 1
        %s150 = scalar_lea.sflag [#allocation3], %s149
        %s151 = sand.u32 %s49, 1
        %s152 = smul.addr %s151, 64
        %s153 = scalar_lea.vmem [#allocation6], %s152
        // Predicated region
        $region33: #{tpu_custom_call.1} parent=27 // pred_check
          %p154 = pneg %p62
        $region34: #{tpu_custom_call.1} parent=27 // pred_check_branch
          %156 = sbr.rel (%p154) target = $region36
        $region35: #{tpu_custom_call.1} parent=27 // pred_region
          %157 = dma.done %s150, 1024
        $region36: #{tpu_custom_call.1} parent=27 // pred_fallthru
          _
        %158 = sfence
        %p159 = pneg %p36
        %p160 = pneg %p33
        %s161 = sand.u32 %s49, 1
        %s162 = scalar_lea.sflag [#allocation3], %s161
        %s163 = sand.u32 %s49, 1
        %s164 = smul.addr %s163, 64
        %s165 = scalar_lea.vmem [#allocation6], %s164
        %p166 = pneg %p62
        %p167 = pneg %p59
        %p168 = pneg %p88
        %p169 = pneg %p85
        %s170 = sand.u32 %s75, 1
        %s171 = scalar_lea.sflag [#allocation4], %s170
        %s172 = sand.u32 %s75, 1
        %s173 = smul.addr %s172, 64
        %s174 = scalar_lea.vmem [#allocation7], %s173
        %s175 = smul.u32 2, %s20
        %s176 = smul.u32 2, %s20
        %s177 = sld [smem:[#allocation2]]
        %s178 = sld [smem:[#allocation2 + $0x1]]
        %s179 = sld [smem:[#allocation2 + $0x2]]
        %s180 = sld [smem:[#allocation2 + $0x3]]
        %v181 = vlaneseq
        %v182 = vand.u32 %v181, 127
        %v183 = vadd.s32 %v182, 128
        %v184 = vadd.s32 %v182, 256
        %v185 = vadd.s32 %v182, 384
        %v186 = vand.u32 %v182, 1
        %v187 = vand.u32 %v183, 1
        %v188 = vand.u32 %v184, 1
        %v189 = vand.u32 %v185, 1
        %vm190 = vcmp.eq.s32.totalorder %v186, 0
        %vm191 = vcmp.eq.s32.totalorder %v187, 0
        %vm192 = vcmp.eq.s32.totalorder %v188, 0
        %vm193 = vcmp.eq.s32.totalorder %v189, 0
        %s194 = ssub.f32 0.0, %s178
        %v195 = vstv %s194
        %v196 = vsel %vm190, %v195, 0.0
        %v197 = vsel %vm191, %v195, 0.0
        %v198 = vsel %vm192, %v195, 0.0
        %v199 = vsel %vm193, %v195, 0.0
        %v200 = vstv %s178
        %v201 = vsel %vm190, 0.0, %v200
        %v202 = vsel %vm191, 0.0, %v200
        %v203 = vsel %vm192, 0.0, %v200
        %v204 = vsel %vm193, 0.0, %v200
        %v205 = vstv %s179
        %v206 = vstv %s180
        %v207 = vsel %vm190, %v205, %v206
        %v208 = vsel %vm191, %v205, %v206
        %v209 = vsel %vm192, %v205, %v206
        %v210 = vsel %vm193, %v205, %v206
        %v211 = vld [vmem:[%s153] sm:$0xff]
        %v212 = vld [vmem:[%s153 + $0x8] sm:$0xff]
        %v213 = vld [vmem:[%s153 + $0x10] sm:$0xff]
        %v214 = vld [vmem:[%s153 + $0x18] sm:$0xff]
        %v215 = vld [vmem:[%s153 + $0x20] sm:$0xff]
        %v216 = vld [vmem:[%s153 + $0x28] sm:$0xff]
        %v217 = vld [vmem:[%s153 + $0x30] sm:$0xff]
        %v218 = vld [vmem:[%s153 + $0x38] sm:$0xff]
        %219 = vrot.lane.b32.xlu0 %v211, 127
        %v220 = vpop.permute.xlu0 %219
        %221 = vrot.lane.b32.xlu0 %v215, 127
        %v222 = vpop.permute.xlu0 %221
        %223 = vrot.lane.b32.xlu0 %v212, 127
        %v224 = vpop.permute.xlu0 %223
        %225 = vrot.lane.b32.xlu0 %v216, 127
        %v226 = vpop.permute.xlu0 %225
        %227 = vrot.lane.b32.xlu0 %v213, 127
        %v228 = vpop.permute.xlu0 %227
        %229 = vrot.lane.b32.xlu0 %v217, 127
        %v230 = vpop.permute.xlu0 %229
        %231 = vrot.lane.b32.xlu0 %v214, 127
        %v232 = vpop.permute.xlu0 %231
        %233 = vrot.lane.b32.xlu0 %v218, 127
        %v234 = vpop.permute.xlu0 %233
        %vm235 = vcmp.lt.s32.totalorder %v182, 127
        %v236 = vsel %vm235, %v228, %v232
        %v237 = vsel %vm235, %v230, %v234
        %v238 = vsel %vm235, %v224, %v228
        %v239 = vsel %vm235, %v226, %v230
        %v240 = vsel %vm235, %v220, %v224
        %v241 = vsel %vm235, %v222, %v226
        %v242 = vsel %vm235, %v232, %v220
        %v243 = vsel %vm235, %v234, %v222
        %244 = vrot.lane.b32.xlu0 %v211, 1
        %v245 = vpop.permute.xlu0 %244
        %246 = vrot.lane.b32.xlu0 %v215, 1
        %v247 = vpop.permute.xlu0 %246
        %248 = vrot.lane.b32.xlu0 %v212, 1
        %v249 = vpop.permute.xlu0 %248
        %250 = vrot.lane.b32.xlu0 %v216, 1
        %v251 = vpop.permute.xlu0 %250
        %252 = vrot.lane.b32.xlu0 %v213, 1
        %v253 = vpop.permute.xlu0 %252
        %254 = vrot.lane.b32.xlu0 %v217, 1
        %v255 = vpop.permute.xlu0 %254
        %256 = vrot.lane.b32.xlu0 %v214, 1
        %v257 = vpop.permute.xlu0 %256
        %258 = vrot.lane.b32.xlu0 %v218, 1
        %v259 = vpop.permute.xlu0 %258
        %vm260 = vcmp.lt.s32.totalorder %v182, 1
        %v261 = vsel %vm260, %v253, %v257
        %v262 = vsel %vm260, %v255, %v259
        %v263 = vsel %vm260, %v249, %v253
        %v264 = vsel %vm260, %v251, %v255
        %v265 = vsel %vm260, %v245, %v249
        %v266 = vsel %vm260, %v247, %v251
        %v267 = vsel %vm260, %v257, %v245
        %v268 = vsel %vm260, %v259, %v247
        %v269 = vstv %s177
        %v270 = vmul.f32 %v211, %v269
        %v271 = vmul.f32 %v212, %v269
        %v272 = vmul.f32 %v213, %v269
        %v273 = vmul.f32 %v214, %v269
        %v274 = vmul.f32 %v215, %v269
        %v275 = vmul.f32 %v216, %v269
        %v276 = vmul.f32 %v217, %v269
        %v277 = vmul.f32 %v218, %v269
        %v278 = vmul.f32 %v240, %v196
        %v279 = vmul.f32 %v238, %v197
        %v280 = vmul.f32 %v236, %v198
        %v281 = vmul.f32 %v242, %v199
        %v282 = vmul.f32 %v241, %v196
        %v283 = vmul.f32 %v239, %v197
        %v284 = vmul.f32 %v237, %v198
        %v285 = vmul.f32 %v243, %v199
        %v286 = vadd.f32 %v270, %v278
        %v287 = vadd.f32 %v271, %v279
        %v288 = vadd.f32 %v272, %v280
        %v289 = vadd.f32 %v273, %v281
        %v290 = vadd.f32 %v274, %v282
        %v291 = vadd.f32 %v275, %v283
        %v292 = vadd.f32 %v276, %v284
        %v293 = vadd.f32 %v277, %v285
        %v294 = vmul.f32 %v267, %v201
        %v295 = vmul.f32 %v265, %v202
        %v296 = vmul.f32 %v263, %v203
        %v297 = vmul.f32 %v261, %v204
        %v298 = vmul.f32 %v268, %v201
        %v299 = vmul.f32 %v266, %v202
        %v300 = vmul.f32 %v264, %v203
        %v301 = vmul.f32 %v262, %v204
        %v302 = vadd.f32 %v286, %v294
        %v303 = vadd.f32 %v287, %v295
        %v304 = vadd.f32 %v288, %v296
        %v305 = vadd.f32 %v289, %v297
        %v306 = vadd.f32 %v290, %v298
        %v307 = vadd.f32 %v291, %v299
        %v308 = vadd.f32 %v292, %v300
        %v309 = vadd.f32 %v293, %v301
        %v310 = vadd.f32 %v302, %v207
        %v311 = vadd.f32 %v303, %v208
        %v312 = vadd.f32 %v304, %v209
        %v313 = vadd.f32 %v305, %v210
        %v314 = vadd.f32 %v306, %v207
        %v315 = vadd.f32 %v307, %v208
        %v316 = vadd.f32 %v308, %v209
        %v317 = vadd.f32 %v309, %v210
        %318 = vst [vmem:[%s174] sm:$0xff] %v310
        %319 = vst [vmem:[%s174 + $0x8] sm:$0xff] %v311
        %320 = vst [vmem:[%s174 + $0x10] sm:$0xff] %v312
        %321 = vst [vmem:[%s174 + $0x18] sm:$0xff] %v313
        %322 = vst [vmem:[%s174 + $0x20] sm:$0xff] %v314
        %323 = vst [vmem:[%s174 + $0x28] sm:$0xff] %v315
        %324 = vst [vmem:[%s174 + $0x30] sm:$0xff] %v316
        %325 = vst [vmem:[%s174 + $0x38] sm:$0xff] %v317
        %s326 = sand.u32 %s75, 1
        %s327 = scalar_lea.sflag [#allocation4], %s326
        %s328 = sand.u32 %s75, 1
        %s329 = smul.addr %s328, 64
        %s330 = scalar_lea.vmem [#allocation7], %s329
        // Predicated region
        $region37: #{tpu_custom_call.1} parent=27 // pred_check
          %p331 = pneg %p85
        $region38: #{tpu_custom_call.1} parent=27 // pred_check_branch
          %333 = sbr.rel (%p331) target = $region40
        $region39: #{tpu_custom_call.1} parent=27 // pred_region
          %s334 = smul.u32 2, %s20
          %s336 = ssub.s32 1024, 1024
          %337 = vsyncadd %s327, %s336
          %s338 = smul.addr %s334, 4
          %s339 = smul.addr %s338, 128
          %s340 = scalar_lea.hbm %s2, %s339
          %s341 = sshll.u32 %s330, 4
          %s342 = int_to_ptr.vmem [resolvable:$true] %s341
          %347 = dma.vmem_to_hbm [thread:$0]  %s342, 1024, %s340, %s327, 512, 512, 32
        $region40: #{tpu_custom_call.1} parent=27 // pred_fallthru
          _
      $region28: #{tpu_custom_call.1} parent=5 // pred_fallthru
        _
      %p348 = scmp.le.s32.totalorder 2, %s15
      // Predicated region
      $region41: #{tpu_custom_call.1} parent=5 // pred_check
        %p349 = pneg %p348
      $region42: #{tpu_custom_call.1} parent=5 // pred_check_branch
        %351 = sbr.rel (%p349) target = $region44
      $region43: #{tpu_custom_call.1} parent=5 // pred_region
        %s352 = ssub.s32 %s15, 2
        // Predicated region
        $region45: #{tpu_custom_call.1} parent=43 // pred_check
          %p353 = pneg %p91
        $region46: #{tpu_custom_call.1} parent=43 // pred_check_branch
          %355 = sbr.rel (%p353) target = $region48
        $region47: #{tpu_custom_call.1} parent=43 // pred_region
          %s356 = sand.u32 %s76, 1
          %s357 = scalar_lea.sflag [#allocation4], %s356
          %s358 = sand.u32 %s76, 1
          %s359 = smul.addr %s358, 64
          %s360 = scalar_lea.vmem [#allocation7], %s359
          %361 = dma.done %s357, 1024
        $region48: #{tpu_custom_call.1} parent=43 // pred_fallthru
          _
      $region44: #{tpu_custom_call.1} parent=5 // pred_fallthru
        _
    $region6: #{tpu_custom_call.1} parent=1 // loop_footer
      %s19 = sadd.s32 1, %s15
    $region7: #{tpu_custom_call.1} parent=1 // loop_footer_branch
      %14 = sbr.rel target = $region3
    $region8: #{tpu_custom_call.1} parent=1 // loop_exit
      _
    %362 = vsyncpa [#allocation3], 1
    %s363 = scalar_lea.sflag [#allocation3], 1
    %364 = vsyncpa %s363, 1
    %365 = vsyncpa [#allocation4], 1
    %s366 = scalar_lea.sflag [#allocation4], 1
    %367 = vsyncpa %s366, 1
    %368 = vsyncpa [#allocation5], 1
    %s369 = scalar_lea.sflag [#allocation5], 1
    %370 = vsyncpa %s369, 1

</llo_original>
